<compile_context>
chip_gen: v7x
topology: tpu7x:2x2x1
jax: 0.10.0
libtpu: 0.0.40
codegen_flags: <defaults>
</compile_context>

<pallas_src>
import functools

import jax
import jax.numpy as jnp
from jax.experimental import pallas as pl
from jax.experimental.pallas import tpu as pltpu

A_SIZE = 4          # fc2 out_features in the PyTorch module
OUT_PAD = 128       # lane-dense padded fc2 width used for in-VMEM compute


def _round_up(x, m):
    return (x + m - 1) // m * m


def policy_kernel(x_ref, w1_ref, b1_ref, w2_ref, b2_ref, o_ref):
    """Fused fc1 -> sigmoid -> fc2(pad 128) -> log_softmax -> compact store."""
    # fc1 on the MXU: f32 x loaded from HBM, cast to bf16 in-kernel,
    # bf16 operands, f32 accumulation.
    x = x_ref[...].astype(jnp.bfloat16)
    h = jnp.dot(x, w1_ref[...], preferred_element_type=jnp.float32)
    h = h + b1_ref[...]                                        # (tm, D_hid) f32

    # Exact sigmoid (exp rides the EUP slot; divide is negligible at (tm, D_hid)).
    h = 1.0 / (1.0 + jnp.exp(-h))

    # fc2: bf16 operands (K = D_hid, precision non-issue), f32 accumulation.
    logits = jnp.dot(h.astype(jnp.bfloat16), w2_ref[...],
                     preferred_element_type=jnp.float32)       # (tm, 128)
    logits = logits + b2_ref[...]                              # pad bias = -inf

    # log_softmax along the last dim. Padded columns are -inf -> exp() = 0,
    # so they do not corrupt max / sum.
    m = jnp.max(logits, axis=-1, keepdims=True)
    shifted = logits - m
    lse = jnp.log(jnp.sum(jnp.exp(shifted), axis=-1, keepdims=True))

    # Compact store: only the 4 real action columns go back to HBM.
    o_ref[...] = (shifted - lse)[:, :A_SIZE]


@functools.partial(jax.jit, static_argnames=("tm",))
def policy_forward(features, w1, b1, w2, b2, *, tm=512):
    """squeeze (glue) + gridded Pallas kernel; returns (B, 4) log-probs."""
    # Explicit axis=1 squeeze (torch.squeeze drops every size-1 dim; the
    # module's usage implies a (B, 1, D_in) input).
    x = jnp.squeeze(features, axis=1) if features.ndim == 3 else features
    B, d_in = x.shape
    d_hid = w1.shape[1]
    a_size = w2.shape[1]

    # Lane-dense padded fc2: bf16 zero weight columns, f32 -inf bias padding.
    w2p = jnp.zeros((d_hid, OUT_PAD), jnp.bfloat16).at[:, :a_size].set(
        w2.astype(jnp.bfloat16))
    b2p = jnp.full((1, OUT_PAD), -jnp.inf, jnp.float32).at[:, :a_size].set(
        b2.reshape(1, a_size).astype(jnp.float32))
    w1_bf = w1.astype(jnp.bfloat16)        # tiny, one-time cast, VMEM-resident
    b1f = b1.reshape(1, d_hid).astype(jnp.float32)

    # Batch tiling: >= 2 grid steps when B allows it (v7x megacore occupancy),
    # otherwise a single full-batch block. tm stays a multiple of 8.
    if B >= 16:
        tm = min(tm, _round_up(pl.cdiv(B, 2), 8))
    else:
        tm = B
    grid = (pl.cdiv(B, tm),)

    cost = pl.CostEstimate(
        flops=2 * B * (d_in * d_hid + d_hid * OUT_PAD),
        transcendentals=B * (d_hid + OUT_PAD),
        bytes_accessed=(B * d_in * 4 + B * A_SIZE * 4
                        + w1_bf.size * 2 + w2p.size * 2
                        + b1f.size * 4 + b2p.size * 4),
    )

    out = pl.pallas_call(
        policy_kernel,
        out_shape=jax.ShapeDtypeStruct((B, A_SIZE), jnp.float32),
        grid_spec=pltpu.PrefetchScalarGridSpec(
            num_scalar_prefetch=0,
            grid=grid,
            in_specs=[
                # x: f32, tiled over batch, pipelined.
                pl.BlockSpec((tm, d_in), lambda i: (i, 0)),
                # weights / biases: constant index_map -> VMEM-resident.
                pl.BlockSpec((d_in, d_hid), lambda i: (0, 0)),
                pl.BlockSpec((1, d_hid), lambda i: (0, 0)),
                pl.BlockSpec((d_hid, OUT_PAD), lambda i: (0, 0)),
                pl.BlockSpec((1, OUT_PAD), lambda i: (0, 0)),
            ],
            # Compact (tm, 4) output block: last dim equals the full array dim.
            out_specs=pl.BlockSpec((tm, A_SIZE), lambda i: (i, 0)),
        ),
        compiler_params=pltpu.CompilerParams(
            dimension_semantics=("parallel",),      # megacore split on v7x
            vmem_limit_bytes=32 * 1024 * 1024,
        ),
        cost_estimate=cost,
    )(x, w1_bf, b1f, w2p, b2p)

    return out


def init_params(key, input_size, output_size, a_size=A_SIZE):
    """Synthetic nn.Linear-style params, stored as (in, out) so x @ W + b."""
    k1, k2, k3, k4 = jax.random.split(key, 4)
    s1 = 1.0 / jnp.sqrt(jnp.float32(input_size))
    s2 = 1.0 / jnp.sqrt(jnp.float32(output_size))
    w1 = jax.random.uniform(k1, (input_size, output_size), jnp.float32, -s1, s1)
    b1 = jax.random.uniform(k2, (1, output_size), jnp.float32, -s1, s1)
    w2 = jax.random.uniform(k3, (output_size, a_size), jnp.float32, -s2, s2)
    b2 = jax.random.uniform(k4, (1, a_size), jnp.float32, -s2, s2)
    return w1, b1, w2, b2


def reference_forward(features, w1, b1, w2, b2):
    """Pure-JAX f32 reference matching the original PyTorch module."""
    x = jnp.squeeze(features, axis=1)
    h = jax.nn.sigmoid(x @ w1 + b1.reshape(1, -1))
    logits = h @ w2 + b2.reshape(1, -1)
    return jax.nn.log_softmax(logits, axis=1)


if __name__ == "__main__":
    # Small shapes consistent with the module: input_size=32, output_size=16,
    # 4 actions; batch 64 exercises a real 2-step "parallel" grid.
    B, INPUT_SIZE, OUTPUT_SIZE = 64, 32, 16

    key = jax.random.PRNGKey(0)
    k_feat, k_param = jax.random.split(key)
    features = jax.random.normal(k_feat, (B, 1, INPUT_SIZE), dtype=jnp.float32)
    w1, b1, w2, b2 = init_params(k_param, INPUT_SIZE, OUTPUT_SIZE, A_SIZE)

    out = jax.block_until_ready(policy_forward(features, w1, b1, w2, b2))

    ref = reference_forward(features, w1, b1, w2, b2)
    assert out.shape == (B, A_SIZE), out.shape
    assert bool(jnp.all(jnp.isfinite(out))), "non-finite log-probs"
    assert jnp.allclose(out, ref, atol=2e-2, rtol=2e-2), "mismatch vs f32 reference"

    print("KERNEL_OK")
</pallas_src>

<mosaic_0001>
module attributes {stable_mosaic.version = 11 : i64} {
  func.func @policy_kernel(%arg0: i32, %arg1: memref<32x32xf32, #tpu.memory_space<vmem>>, %arg2: memref<32x16xbf16, #tpu.memory_space<vmem>>, %arg3: memref<1x16xf32, #tpu.memory_space<vmem>>, %arg4: memref<16x128xbf16, #tpu.memory_space<vmem>>, %arg5: memref<1x128xf32, #tpu.memory_space<vmem>>, %arg6: memref<32x4xf32, #tpu.memory_space<vmem>>) attributes {dimension_semantics = [#tpu.dimension_semantics<parallel>], iteration_bounds = array<i64: 2>, scalar_prefetch = 0 : i64, scratch_operands = 0 : i64, tpu.core_type = #tpu.core_type<tc>, window_params = [{transform_indices = @transform_0, window_bounds = array<i64: 32, 32>}, {pipeline_mode = #tpu.pipeline_mode<synchronous>, transform_indices = @transform_1, window_bounds = array<i64: 32, 16>}, {pipeline_mode = #tpu.pipeline_mode<synchronous>, transform_indices = @transform_2, window_bounds = array<i64: 1, 16>}, {pipeline_mode = #tpu.pipeline_mode<synchronous>, transform_indices = @transform_3, window_bounds = array<i64: 16, 128>}, {pipeline_mode = #tpu.pipeline_mode<synchronous>, transform_indices = @transform_4, window_bounds = array<i64: 1, 128>}, {transform_indices = @transform_5, window_bounds = array<i64: 32, 4>}]} {
    %c0 = arith.constant 0 : index
    %c0_0 = arith.constant 0 : index
    %0 = vector.load %arg1[%c0, %c0_0] : memref<32x32xf32, #tpu.memory_space<vmem>>, vector<32x32xf32>
    %1 = arith.truncf %0 : vector<32x32xf32> to vector<32x32xbf16>
    %c0_1 = arith.constant 0 : index
    %c0_2 = arith.constant 0 : index
    %2 = vector.load %arg2[%c0_1, %c0_2] : memref<32x16xbf16, #tpu.memory_space<vmem>>, vector<32x16xbf16>
    %cst = arith.constant dense<0.000000e+00> : vector<32x16xf32>
    %3 = tpu.matmul %1, %2, %cst {dimension_numbers = #tpu.dot_dimension_numbers<[1], [0], [0], [1], [0, 0, 1, 1], [], []>} : vector<32x32xbf16>, vector<32x16xbf16>, vector<32x16xf32> -> vector<32x16xf32>
    %c0_3 = arith.constant 0 : index
    %c0_4 = arith.constant 0 : index
    %4 = vector.load %arg3[%c0_3, %c0_4] : memref<1x16xf32, #tpu.memory_space<vmem>>, vector<1x16xf32>
    %5 = vector.broadcast %4 : vector<1x16xf32> to vector<32x16xf32>
    %6 = arith.addf %3, %5 : vector<32x16xf32>
    %cst_5 = arith.constant 0.000000e+00 : f32
    %7 = vector.broadcast %cst_5 : f32 to vector<32x16xf32>
    %8 = arith.subf %7, %6 : vector<32x16xf32>
    %9 = math.exp %8 : vector<32x16xf32>
    %cst_6 = arith.constant 1.000000e+00 : f32
    %10 = vector.broadcast %cst_6 : f32 to vector<32x16xf32>
    %11 = arith.addf %10, %9 : vector<32x16xf32>
    %cst_7 = arith.constant 1.000000e+00 : f32
    %12 = vector.broadcast %cst_7 : f32 to vector<32x16xf32>
    %13 = arith.divf %12, %11 : vector<32x16xf32>
    %14 = arith.truncf %13 : vector<32x16xf32> to vector<32x16xbf16>
    %c0_8 = arith.constant 0 : index
    %c0_9 = arith.constant 0 : index
    %15 = vector.load %arg4[%c0_8, %c0_9] : memref<16x128xbf16, #tpu.memory_space<vmem>>, vector<16x128xbf16>
    %cst_10 = arith.constant dense<0.000000e+00> : vector<32x128xf32>
    %16 = tpu.matmul %14, %15, %cst_10 {dimension_numbers = #tpu.dot_dimension_numbers<[1], [0], [0], [1], [0, 0, 1, 1], [], []>} : vector<32x16xbf16>, vector<16x128xbf16>, vector<32x128xf32> -> vector<32x128xf32>
    %c0_11 = arith.constant 0 : index
    %c0_12 = arith.constant 0 : index
    %17 = vector.load %arg5[%c0_11, %c0_12] : memref<1x128xf32, #tpu.memory_space<vmem>>, vector<1x128xf32>
    %18 = vector.broadcast %17 : vector<1x128xf32> to vector<32x128xf32>
    %19 = arith.addf %16, %18 : vector<32x128xf32>
    %cst_13 = arith.constant dense<0xFF800000> : vector<32xf32>
    %20 = vector.multi_reduction <maximumf>, %19, %cst_13 [1] : vector<32x128xf32> to vector<32xf32>
    %21 = vector.shape_cast %20 : vector<32xf32> to vector<32x1xf32>
    %22 = vector.broadcast %21 : vector<32x1xf32> to vector<32x128xf32>
    %23 = arith.subf %19, %22 : vector<32x128xf32>
    %24 = math.exp %23 : vector<32x128xf32>
    %cst_14 = arith.constant dense<0.000000e+00> : vector<32xf32>
    %25 = vector.multi_reduction <add>, %24, %cst_14 [1] : vector<32x128xf32> to vector<32xf32>
    %26 = vector.shape_cast %25 : vector<32xf32> to vector<32x1xf32>
    %27 = math.log %26 : vector<32x1xf32>
    %28 = vector.broadcast %27 : vector<32x1xf32> to vector<32x128xf32>
    %29 = arith.subf %23, %28 : vector<32x128xf32>
    %30 = vector.extract_strided_slice %29 {offsets = [0, 0], sizes = [32, 4], strides = [1, 1]} : vector<32x128xf32> to vector<32x4xf32>
    %c0_15 = arith.constant 0 : index
    %c0_16 = arith.constant 0 : index
    %31 = vector.load %arg6[%c0_15, %c0_16] : memref<32x4xf32, #tpu.memory_space<vmem>>, vector<32x4xf32>
    tpu.vector_store %arg6[%c0_15, %c0_16], %30 {strides = array<i32>} : memref<32x4xf32, #tpu.memory_space<vmem>>, vector<32x4xf32>,
    return
  }
  func.func @transform_0(%arg0: i32) -> (i32, i32) {
    %c0_i32 = arith.constant 0 : i32
    %c0_i32_0 = arith.constant 0 : i32
    return %arg0, %c0_i32 : i32, i32
  }
  func.func @transform_1(%arg0: i32) -> (i32, i32) {
    %c0_i32 = arith.constant 0 : i32
    %c0_i32_0 = arith.constant 0 : i32
    %c0_i32_1 = arith.constant 0 : i32
    return %c0_i32, %c0_i32_0 : i32, i32
  }
  func.func @transform_2(%arg0: i32) -> (i32, i32) {
    %c0_i32 = arith.constant 0 : i32
    %c0_i32_0 = arith.constant 0 : i32
    %c0_i32_1 = arith.constant 0 : i32
    return %c0_i32, %c0_i32_0 : i32, i32
  }
  func.func @transform_3(%arg0: i32) -> (i32, i32) {
    %c0_i32 = arith.constant 0 : i32
    %c0_i32_0 = arith.constant 0 : i32
    %c0_i32_1 = arith.constant 0 : i32
    return %c0_i32, %c0_i32_0 : i32, i32
  }
  func.func @transform_4(%arg0: i32) -> (i32, i32) {
    %c0_i32 = arith.constant 0 : i32
    %c0_i32_0 = arith.constant 0 : i32
    %c0_i32_1 = arith.constant 0 : i32
    return %c0_i32, %c0_i32_0 : i32, i32
  }
  func.func @transform_5(%arg0: i32) -> (i32, i32) {
    %c0_i32 = arith.constant 0 : i32
    %c0_i32_0 = arith.constant 0 : i32
    return %arg0, %c0_i32 : i32, i32
  }
}

</mosaic_0001>

<llo_original>
// kernel: policy_forward.1
$region0: #{policy_forward.1}
  #allocation0 [shape = 'u32[]', space=smem, size = 0x4, offset = 0x4, fixed_abs, tag = 'smem constant byte address 0x4 - core index']
  #allocation1 [shape = 'u32[144,128]{1,0:T(1,128)}', space=vmem, size = 0x12000, scoped, tag = 'internal scratch']
  %s0 = inlined_call_operand.vmem [shape: f32[64,32], index: 0, kind: input, shape index: {}]
  %s1 = inlined_call_operand.vmem [shape: bf16[32,16], index: 1, kind: input, shape index: {}]
  %s2 = inlined_call_operand.vmem [shape: f32[1,16], index: 2, kind: input, shape index: {}]
  %s3 = inlined_call_operand.vmem [shape: bf16[16,128], index: 3, kind: input, shape index: {}]
  %s4 = inlined_call_operand.vmem [shape: f32[1,128], index: 4, kind: input, shape index: {}]
  %s5 = inlined_call_operand.vmem [shape: f32[64,4], index: 5, kind: output, shape index: {}]
  %s6 = sld [smem:[#allocation0]]
  $region53: #{policy_forward.1} parent=0
    _
  %s8 = ssub.s32 1, %s6
  %s9 = scalar_select 0, %s8, %s6
  loop: start=0, step=1, limit=4
  $region2: #{policy_forward.1} parent=0 // loop_pre_header
    _
  $region3: #{policy_forward.1} parent=0 // loop_header
    %s11 = sphi 0, %s15
    %p12 = scmp.ge.s32.totalorder %s11, 4
    %s21 = sphi 0, %s23
    %s24 = sphi 0, %s21
    %s25 = sphi 0, %s24
    %s41 = sphi 0, %s25
    %s45 = sphi 0, %s45
    %s47 = sphi 0, %s45
    %s48 = sphi 0, %s47
    %s62 = sphi 0, %s48
    %s66 = sphi 0, %s66
    %s68 = sphi 0, %s66
    %s69 = sphi 0, %s68
    %s83 = sphi 0, %s69
    %s87 = sphi 0, %s87
    %s89 = sphi 0, %s87
    %s90 = sphi 0, %s89
    %s104 = sphi 0, %s90
    %s108 = sphi 0, %s108
    %s110 = sphi 0, %s108
    %s111 = sphi 0, %s110
    %s125 = sphi 0, %s111
    %s131 = sphi 0, %s133
    %s134 = sphi 0, %s131
    %s135 = sphi 0, %s134
    %s151 = sphi 0, %s135
  $region4: #{policy_forward.1} parent=0 // loop_header_branch
    %14 = sbr.rel (%p12) target = $region8
  $region5: #{policy_forward.1} parent=0 // loop_body
    %s16 = ssub.s32 %s11, 1
    %s17 = ssub.s32 %s11, 2
    %s18 = sadd.s32 %s11, 1
    %s19 = ssub.s32 %s11, %s18
    %p20 = scmp.eq.s32.totalorder %s19, 0
    %s22 = sadd.s32 %s21, 1
    %s23 = scalar_select %p20, %s21, %s22
    %p26 = pneg %p20
    %p27 = scmp.eq.s32.totalorder %s11, 1
    %p28 = por %p26, %p27
    %p29 = scmp.ne.s32.totalorder %s21, %s24
    %p30 = scmp.eq.s32.totalorder %s11, 0
    %p31 = por %p29, %p30
    %p32 = scmp.ne.s32.totalorder %s21, %s24
    %p33 = scmp.eq.s32.totalorder %s16, 1
    %p34 = por %p32, %p33
    %p35 = scmp.ne.s32.totalorder %s24, %s25
    %p36 = scmp.eq.s32.totalorder %s16, 0
    %p37 = por %p35, %p36
    %p38 = scmp.ne.s32.totalorder %s24, %s25
    %p39 = scmp.eq.s32.totalorder %s17, 1
    %p40 = por %p38, %p39
    %p42 = scmp.ne.s32.totalorder %s25, %s41
    %p43 = scmp.eq.s32.totalorder %s17, 0
    %p44 = por %p42, %p43
    %s46 = sadd.s32 %s45, 1
    %p49 = scmp.eq.s32.totalorder %s11, 1
    %p50 = scmp.ne.s32.totalorder %s45, %s47
    %p51 = scmp.eq.s32.totalorder %s11, 0
    %p52 = por %p50, %p51
    %p53 = scmp.ne.s32.totalorder %s45, %s47
    %p54 = scmp.eq.s32.totalorder %s16, 1
    %p55 = por %p53, %p54
    %p56 = scmp.ne.s32.totalorder %s47, %s48
    %p57 = scmp.eq.s32.totalorder %s16, 0
    %p58 = por %p56, %p57
    %p59 = scmp.ne.s32.totalorder %s47, %s48
    %p60 = scmp.eq.s32.totalorder %s17, 1
    %p61 = por %p59, %p60
    %p63 = scmp.ne.s32.totalorder %s48, %s62
    %p64 = scmp.eq.s32.totalorder %s17, 0
    %p65 = por %p63, %p64
    %s67 = sadd.s32 %s66, 1
    %p70 = scmp.eq.s32.totalorder %s11, 1
    %p71 = scmp.ne.s32.totalorder %s66, %s68
    %p72 = scmp.eq.s32.totalorder %s11, 0
    %p73 = por %p71, %p72
    %p74 = scmp.ne.s32.totalorder %s66, %s68
    %p75 = scmp.eq.s32.totalorder %s16, 1
    %p76 = por %p74, %p75
    %p77 = scmp.ne.s32.totalorder %s68, %s69
    %p78 = scmp.eq.s32.totalorder %s16, 0
    %p79 = por %p77, %p78
    %p80 = scmp.ne.s32.totalorder %s68, %s69
    %p81 = scmp.eq.s32.totalorder %s17, 1
    %p82 = por %p80, %p81
    %p84 = scmp.ne.s32.totalorder %s69, %s83
    %p85 = scmp.eq.s32.totalorder %s17, 0
    %p86 = por %p84, %p85
    %s88 = sadd.s32 %s87, 1
    %p91 = scmp.eq.s32.totalorder %s11, 1
    %p92 = scmp.ne.s32.totalorder %s87, %s89
    %p93 = scmp.eq.s32.totalorder %s11, 0
    %p94 = por %p92, %p93
    %p95 = scmp.ne.s32.totalorder %s87, %s89
    %p96 = scmp.eq.s32.totalorder %s16, 1
    %p97 = por %p95, %p96
    %p98 = scmp.ne.s32.totalorder %s89, %s90
    %p99 = scmp.eq.s32.totalorder %s16, 0
    %p100 = por %p98, %p99
    %p101 = scmp.ne.s32.totalorder %s89, %s90
    %p102 = scmp.eq.s32.totalorder %s17, 1
    %p103 = por %p101, %p102
    %p105 = scmp.ne.s32.totalorder %s90, %s104
    %p106 = scmp.eq.s32.totalorder %s17, 0
    %p107 = por %p105, %p106
    %s109 = sadd.s32 %s108, 1
    %p112 = scmp.eq.s32.totalorder %s11, 1
    %p113 = scmp.ne.s32.totalorder %s108, %s110
    %p114 = scmp.eq.s32.totalorder %s11, 0
    %p115 = por %p113, %p114
    %p116 = scmp.ne.s32.totalorder %s108, %s110
    %p117 = scmp.eq.s32.totalorder %s16, 1
    %p118 = por %p116, %p117
    %p119 = scmp.ne.s32.totalorder %s110, %s111
    %p120 = scmp.eq.s32.totalorder %s16, 0
    %p121 = por %p119, %p120
    %p122 = scmp.ne.s32.totalorder %s110, %s111
    %p123 = scmp.eq.s32.totalorder %s17, 1
    %p124 = por %p122, %p123
    %p126 = scmp.ne.s32.totalorder %s111, %s125
    %p127 = scmp.eq.s32.totalorder %s17, 0
    %p128 = por %p126, %p127
    %s129 = ssub.s32 %s11, %s18
    %p130 = scmp.eq.s32.totalorder %s129, 0
    %s132 = sadd.s32 %s131, 1
    %s133 = scalar_select %p130, %s131, %s132
    %p136 = pneg %p130
    %p137 = scmp.eq.s32.totalorder %s11, 1
    %p138 = por %p136, %p137
    %p139 = scmp.ne.s32.totalorder %s131, %s134
    %p140 = scmp.eq.s32.totalorder %s11, 0
    %p141 = por %p139, %p140
    %p142 = scmp.ne.s32.totalorder %s131, %s134
    %p143 = scmp.eq.s32.totalorder %s16, 1
    %p144 = por %p142, %p143
    %p145 = scmp.ne.s32.totalorder %s134, %s135
    %p146 = scmp.eq.s32.totalorder %s16, 0
    %p147 = por %p145, %p146
    %p148 = scmp.ne.s32.totalorder %s134, %s135
    %p149 = scmp.eq.s32.totalorder %s17, 1
    %p150 = por %p148, %p149
    %p152 = scmp.ne.s32.totalorder %s135, %s151
    %p153 = scmp.eq.s32.totalorder %s17, 0
    %p154 = por %p152, %p153
    %p155 = scmp.le.s32.totalorder 1, %s11
    %p156 = scmp.lt.s32.totalorder %s11, 3
    %p157 = pnand %p155, %p156
    %p158 = pneg %p157
    // Predicated region
    $region9: #{policy_forward.1} parent=5 // pred_check
      _
    $region10: #{policy_forward.1} parent=5 // pred_check_branch
      %160 = sbr.rel (%p157) target = $region12
    $region11: #{policy_forward.1} parent=5 // pred_region
      %s161 = ssub.s32 %s11, 1
      // Predicated region
      $region13: #{policy_forward.1} parent=11 // pred_check
        %p162 = pneg %p58
      $region14: #{policy_forward.1} parent=11 // pred_check_branch
        %164 = sbr.rel (%p162) target = $region16
      $region15: #{policy_forward.1} parent=11 // pred_region
        _
      $region16: #{policy_forward.1} parent=11 // pred_fallthru
        _
      // Predicated region
      $region17: #{policy_forward.1} parent=11 // pred_check
        %p165 = pneg %p79
      $region18: #{policy_forward.1} parent=11 // pred_check_branch
        %167 = sbr.rel (%p165) target = $region20
      $region19: #{policy_forward.1} parent=11 // pred_region
        _
      $region20: #{policy_forward.1} parent=11 // pred_fallthru
        _
      // Predicated region
      $region21: #{policy_forward.1} parent=11 // pred_check
        %p168 = pneg %p100
      $region22: #{policy_forward.1} parent=11 // pred_check_branch
        %170 = sbr.rel (%p168) target = $region24
      $region23: #{policy_forward.1} parent=11 // pred_region
        _
      $region24: #{policy_forward.1} parent=11 // pred_fallthru
        _
      // Predicated region
      $region25: #{policy_forward.1} parent=11 // pred_check
        %p171 = pneg %p121
      $region26: #{policy_forward.1} parent=11 // pred_check_branch
        %173 = sbr.rel (%p171) target = $region28
      $region27: #{policy_forward.1} parent=11 // pred_region
        _
      $region28: #{policy_forward.1} parent=11 // pred_fallthru
        _
    $region12: #{policy_forward.1} parent=5 // pred_fallthru
      _
    %p174 = scmp.lt.s32.totalorder %s11, 2
    // Predicated region
    $region29: #{policy_forward.1} parent=5 // pred_check
      %p175 = pneg %p174
    $region30: #{policy_forward.1} parent=5 // pred_check_branch
      %177 = sbr.rel (%p175) target = $region32
    $region31: #{policy_forward.1} parent=5 // pred_region
      // Predicated region
      $region33: #{policy_forward.1} parent=31 // pred_check
        %p178 = pneg %p31
      $region34: #{policy_forward.1} parent=31 // pred_check_branch
        %180 = sbr.rel (%p178) target = $region36
      $region35: #{policy_forward.1} parent=31 // pred_region
        %s181 = smul.u32 4, %s11
        %p182 = scmp.lt.s32.totalorder %s181, 7
        %s183 = scalar_select %p182, %s181, 7
        %s184 = smul.addr %s183, 8
        %s185 = scalar_lea.vmem %s0, %s184
        %s186 = smul.u32 4, %s11
      $region36: #{policy_forward.1} parent=31 // pred_fallthru
        _
    $region32: #{policy_forward.1} parent=5 // pred_fallthru
      _
    %p187 = scmp.le.s32.totalorder 1, %s11
    %p188 = scmp.lt.s32.totalorder %s11, 3
    %p189 = pnand %p187, %p188
    %p190 = pneg %p189
    // Predicated region
    $region37: #{policy_forward.1} parent=5 // pred_check
      _
    $region38: #{policy_forward.1} parent=5 // pred_check_branch
      %192 = sbr.rel (%p189) target = $region40
    $region39: #{policy_forward.1} parent=5 // pred_region
      %s193 = ssub.s32 %s11, 1
      %s194 = smul.u32 4, %s16
      %p195 = scmp.lt.s32.totalorder %s194, 7
      %s196 = scalar_select %p195, %s194, 7
      %s197 = smul.addr %s196, 8
      %s198 = scalar_lea.vmem %s0, %s197
      %p199 = pneg %p37
      %p200 = pneg %p34
      %p201 = pneg %p58
      %p202 = pneg %p55
      %p203 = pneg %p79
      %p204 = pneg %p76
      %p205 = pneg %p100
      %p206 = pneg %p97
      %p207 = pneg %p121
      %p208 = pneg %p118
      %p209 = pneg %p147
      %p210 = pneg %p144
      %s211 = smul.u32 4, %s16
      %p212 = scmp.lt.s32.totalorder %s211, 7
      %s213 = scalar_select %p212, %s211, 7
      %s214 = smul.addr %s213, 8
      %s215 = scalar_lea.vmem %s5, %s214
      %s216 = smul.u32 4, %s16
      %p217 = scmp.lt.s32.totalorder %s216, 7
      %s218 = scalar_select %p217, %s216, 7
      %s219 = smul.addr %s218, 8
      %s220 = scalar_lea.vmem %s0, %s219
      %s221 = smul.u32 4, %s16
      %s222 = smul.u32 4, %s16
      %p223 = scmp.lt.s32.totalorder %s222, 7
      %s224 = scalar_select %p223, %s222, 7
      %s225 = smul.addr %s224, 8
      %s226 = scalar_lea.vmem %s5, %s225
      %s227 = smul.u32 4, %s16
      %v229 = vld [vmem:[%s220] sm:$0xff]
      %v230 = vld [vmem:[%s220 + $0x8] sm:$0xff]
      %v231 = vld [vmem:[%s220 + $0x10] sm:$0xff]
      %v232 = vld [vmem:[%s220 + $0x18] sm:$0xff]
      %v233 = vpack.c.bf16 %v230, %v229
      %v234 = vpack.c.bf16 %v232, %v231
      %v235 = vld [vmem:[%s1] sm:$0xf]
      %v236 = vld [vmem:[%s1 + $0x4] sm:$0xf]
      %v237 = vld [vmem:[%s1 + $0x8] sm:$0xf]
      %v238 = vld [vmem:[%s1 + $0xc] sm:$0xf]
      %v239 = vld [vmem:[%s2] sm:$0x1]
      %v241 = vlaneseq
      %v242 = vshrl.u32 %v241, 7
      %v243 = vsub.s32 0, %v242
      %v244 = vrot.slane %v239, %v243
      %v250 = vunpack.c.l.b16 %v235
      %v251 = vunpack.c.l.b16 %v236
      %v252 = vunpack.c.l.b16 %v237
      %v253 = vunpack.c.l.b16 %v238
      %v254 = vpack.c.b16 %v251, %v250
      %v255 = vpack.c.b16 %v253, %v252
      %vm258 = vcmask 261120
      %v260 = vsel %vm258, %v233, 0
      %v263 = vsel %vm258, %v234, 0
      %265 = vmatprep.subr.bf16.mxu0 0
      %266 = vmatpush1.bf16.msra.mxu0 %v254
      %267 = vmatprep.subr.bf16.mxu0 0
      %268 = vmatpush1.bf16.msra.mxu0 %v255
      %269 = vmatprep.subr.bf16.mxu0 0
      %270 = vmatpush1.bf16.msra.mxu0 0
      %271 = vmatprep.subr.bf16.mxu0 0
      %272 = vmatpush1.bf16.msra.mxu0 0
      %273 = vmatprep.subr.bf16.mxu0 0
      %274 = vmatpush1.bf16.msra.mxu0 0
      %275 = vmatprep.subr.bf16.mxu0 0
      %276 = vmatpush1.bf16.msra.mxu0 0
      %277 = vmatprep.subr.bf16.mxu0 0
      %278 = vmatpush1.bf16.msra.mxu0 0
      %279 = vmatprep.subr.bf16.mxu0 0
      %280 = vmatpush1.bf16.msra.mxu0 0
      %281 = vmatprep.subr.bf16.mxu0 0
      %282 = vmatpush1.bf16.msra.mxu0 0
      %283 = vmatprep.subr.bf16.mxu0 0
      %284 = vmatpush1.bf16.msra.mxu0 0
      %285 = vmatprep.subr.bf16.mxu0 0
      %286 = vmatpush1.bf16.msra.mxu0 0
      %287 = vmatprep.subr.bf16.mxu0 0
      %288 = vmatpush1.bf16.msra.mxu0 0
      %289 = vmatprep.subr.bf16.mxu0 0
      %290 = vmatpush1.bf16.msra.mxu0 0
      %291 = vmatprep.subr.bf16.mxu0 0
      %292 = vmatpush1.bf16.msra.mxu0 0
      %293 = vmatprep.subr.bf16.mxu0 0
      %294 = vmatpush1.bf16.msra.mxu0 0
      %295 = vmatprep.subr.bf16.mxu0 0
      %296 = vmatpush1.bf16.msra.mxu0 0
      %297 = vmatprep.mubr.bf16.mxu0 0
      %298 = vmatmul.mubr.bf16.gmra.mrb[0].mxu0 %v260
      %v299 = vpop.f32.mrb[0].mxu0
      %v300 = vadd.f32 %v244, %v299
      %v301 = vpop.f32.mrb[0].mxu0
      %v302 = vpop.f32.mrb[0].mxu0
      %v303 = vadd.f32 %v244, %v302
      %v304 = vpop.f32.mrb[0].mxu0
      %305 = vmatprep.mubr.bf16.mxu0 0
      %306 = vmatmul.mubr.bf16.gmra.mrb[0].mxu0 %v263
      %v307 = vpop.f32.mrb[0].mxu0
      %v308 = vadd.f32 %v244, %v307
      %v309 = vpop.f32.mrb[0].mxu0
      %v310 = vpop.f32.mrb[0].mxu0
      %v311 = vadd.f32 %v244, %v310
      %v312 = vpop.f32.mrb[0].mxu0
      %313 = vdwg.mxu0
      %v314 = vsub.f32 0.0, %v300
      %v315 = vsub.f32 0.0, %v303
      %v316 = vsub.f32 0.0, %v308
      %v317 = vsub.f32 0.0, %v311
      %v318 = vmul.f32 %v314, 1.442695
      %v319 = vpow.pop %v318
      %v320 = vmul.f32 %v315, 1.442695
      %v321 = vpow.pop %v320
      %v322 = vmul.f32 %v316, 1.442695
      %v323 = vpow.pop %v322
      %v324 = vmul.f32 %v317, 1.442695
      %v325 = vpow.pop %v324
      %v326 = vadd.f32 %v319, 1.0
      %v327 = vadd.f32 %v321, 1.0
      %v328 = vadd.f32 %v323, 1.0
      %v329 = vadd.f32 %v325, 1.0
      %v330 = vrcp.pop %v326
      %v331 = vmul.f32 1.0, %v330
      %v332 = vrcp.pop %v327
      %v333 = vmul.f32 1.0, %v332
      %v334 = vrcp.pop %v328
      %v335 = vmul.f32 1.0, %v334
      %v336 = vrcp.pop %v329
      %v337 = vmul.f32 1.0, %v336
      %v338 = vpack.c.bf16 %v333, %v331
      %v339 = vpack.c.bf16 %v337, %v335
      %v340 = vld [vmem:[%s3] sm:$0xf]
      %v341 = vld [vmem:[%s3 + $0x4] sm:$0xf]
      %v342 = vld [vmem:[%s4] sm:$0x1]
      %v344 = vlaneseq
      %v345 = vshrl.u32 %v344, 7
      %v346 = vsub.s32 0, %v345
      %v347 = vrot.slane %v342, %v346
      %v351 = vunpack.c.l.b16 %v340
      %v352 = vunpack.c.l.b16 %v341
      %v353 = vpack.c.b16 %v352, %v351
      %vm355 = vcmask 130048
      %v357 = vsel %vm355, %v338, 0
      %v360 = vsel %vm355, %v339, 0
      %362 = vmatprep.subr.bf16.mxu0 0
      %363 = vmatpush1.bf16.msra.mxu0 %v353
      %364 = vmatprep.subr.bf16.mxu0 0
      %365 = vmatpush1.bf16.msra.mxu0 0
      %366 = vmatprep.subr.bf16.mxu0 0
      %367 = vmatpush1.bf16.msra.mxu0 0
      %368 = vmatprep.subr.bf16.mxu0 0
      %369 = vmatpush1.bf16.msra.mxu0 0
      %370 = vmatprep.subr.bf16.mxu0 0
      %371 = vmatpush1.bf16.msra.mxu0 0
      %372 = vmatprep.subr.bf16.mxu0 0
      %373 = vmatpush1.bf16.msra.mxu0 0
      %374 = vmatprep.subr.bf16.mxu0 0
      %375 = vmatpush1.bf16.msra.mxu0 0
      %376 = vmatprep.subr.bf16.mxu0 0
      %377 = vmatpush1.bf16.msra.mxu0 0
      %378 = vmatprep.subr.bf16.mxu0 0
      %379 = vmatpush1.bf16.msra.mxu0 0
      %380 = vmatprep.subr.bf16.mxu0 0
      %381 = vmatpush1.bf16.msra.mxu0 0
      %382 = vmatprep.subr.bf16.mxu0 0
      %383 = vmatpush1.bf16.msra.mxu0 0
      %384 = vmatprep.subr.bf16.mxu0 0
      %385 = vmatpush1.bf16.msra.mxu0 0
      %386 = vmatprep.subr.bf16.mxu0 0
      %387 = vmatpush1.bf16.msra.mxu0 0
      %388 = vmatprep.subr.bf16.mxu0 0
      %389 = vmatpush1.bf16.msra.mxu0 0
      %390 = vmatprep.subr.bf16.mxu0 0
      %391 = vmatpush1.bf16.msra.mxu0 0
      %392 = vmatprep.subr.bf16.mxu0 0
      %393 = vmatpush1.bf16.msra.mxu0 0
      %394 = vmatprep.mubr.bf16.mxu0 0
      %395 = vmatmul.mubr.bf16.gmra.mrb[0].mxu0 %v357
      %v396 = vpop.f32.mrb[0].mxu0
      %v397 = vadd.f32 %v347, %v396
      %v398 = vpop.f32.mrb[0].mxu0
      %v399 = vpop.f32.mrb[0].mxu0
      %v400 = vadd.f32 %v347, %v399
      %v401 = vpop.f32.mrb[0].mxu0
      %402 = vmatprep.mubr.bf16.mxu0 0
      %403 = vmatmul.mubr.bf16.gmra.mrb[0].mxu0 %v360
      %v404 = vpop.f32.mrb[0].mxu0
      %v405 = vadd.f32 %v347, %v404
      %v406 = vpop.f32.mrb[0].mxu0
      %v407 = vpop.f32.mrb[0].mxu0
      %v408 = vadd.f32 %v347, %v407
      %v409 = vpop.f32.mrb[0].mxu0
      %410 = vdwg.mxu0
      %411 = vmax.xlane.f32.xlu0 %v397
      %v412 = vpop.xlane.xlu0 %411
      %413 = vmax.xlane.f32.xlu0 %v400
      %v414 = vpop.xlane.xlu0 %413
      %415 = vmax.xlane.f32.xlu0 %v405
      %v416 = vpop.xlane.xlu0 %415
      %417 = vmax.xlane.f32.xlu0 %v408
      %v418 = vpop.xlane.xlu0 %417
      %v419 = vsub.f32 %v397, %v412
      %v420 = vsub.f32 %v400, %v414
      %v421 = vsub.f32 %v405, %v416
      %v422 = vsub.f32 %v408, %v418
      %v423 = vmul.f32 %v419, 1.442695
      %v424 = vpow.pop %v423
      %v425 = vmul.f32 %v420, 1.442695
      %v426 = vpow.pop %v425
      %v427 = vmul.f32 %v421, 1.442695
      %v428 = vpow.pop %v427
      %v429 = vmul.f32 %v422, 1.442695
      %v430 = vpow.pop %v429
      %431 = vadd.xlane.f32.xlu0 %v424
      %v432 = vpop.xlane.xlu0 %431
      %433 = vadd.xlane.f32.xlu0 %v426
      %v434 = vpop.xlane.xlu0 %433
      %435 = vadd.xlane.f32.xlu0 %v428
      %v436 = vpop.xlane.xlu0 %435
      %437 = vadd.xlane.f32.xlu0 %v430
      %v438 = vpop.xlane.xlu0 %437
      %v439 = vlog2.pop %v432
      %v440 = vmul.f32 %v439, 0.6931472
      %v441 = vlog2.pop %v434
      %v442 = vmul.f32 %v441, 0.6931472
      %v443 = vlog2.pop %v436
      %v444 = vmul.f32 %v443, 0.6931472
      %v445 = vlog2.pop %v438
      %v446 = vmul.f32 %v445, 0.6931472
      %v447 = vsub.f32 %v419, %v440
      %v448 = vsub.f32 %v420, %v442
      %v449 = vsub.f32 %v421, %v444
      %v450 = vsub.f32 %v422, %v446
      %vm451 = vcmask 31744
      %452 = vst.msk [vmem:[%s226] sm:$0xff] %vm451, %v447
      %453 = vst.msk [vmem:[%s226 + $0x8] sm:$0xff] %vm451, %v448
      %454 = vst.msk [vmem:[%s226 + $0x10] sm:$0xff] %vm451, %v449
      %455 = vst.msk [vmem:[%s226 + $0x18] sm:$0xff] %vm451, %v450
      %s456 = smul.u32 4, %s16
      %p457 = scmp.lt.s32.totalorder %s456, 7
      %s458 = scalar_select %p457, %s456, 7
      %s459 = smul.addr %s458, 8
      %s460 = scalar_lea.vmem %s5, %s459
      // Predicated region
      $region41: #{policy_forward.1} parent=39 // pred_check
        %p461 = pneg %p144
      $region42: #{policy_forward.1} parent=39 // pred_check_branch
        %463 = sbr.rel (%p461) target = $region44
      $region43: #{policy_forward.1} parent=39 // pred_region
        %s464 = smul.u32 4, %s16
      $region44: #{policy_forward.1} parent=39 // pred_fallthru
        _
    $region40: #{policy_forward.1} parent=5 // pred_fallthru
      _
    %p465 = scmp.le.s32.totalorder 2, %s11
    // Predicated region
    $region45: #{policy_forward.1} parent=5 // pred_check
      %p466 = pneg %p465
    $region46: #{policy_forward.1} parent=5 // pred_check_branch
      %468 = sbr.rel (%p466) target = $region48
    $region47: #{policy_forward.1} parent=5 // pred_region
      %s469 = ssub.s32 %s11, 2
      // Predicated region
      $region49: #{policy_forward.1} parent=47 // pred_check
        %p470 = pneg %p150
      $region50: #{policy_forward.1} parent=47 // pred_check_branch
        %472 = sbr.rel (%p470) target = $region52
      $region51: #{policy_forward.1} parent=47 // pred_region
        %s473 = smul.u32 4, %s17
        %p474 = scmp.lt.s32.totalorder %s473, 7
        %s475 = scalar_select %p474, %s473, 7
        %s476 = smul.addr %s475, 8
        %s477 = scalar_lea.vmem %s5, %s476
      $region52: #{policy_forward.1} parent=47 // pred_fallthru
        _
    $region48: #{policy_forward.1} parent=5 // pred_fallthru
      _
  $region6: #{policy_forward.1} parent=0 // loop_footer
    %s15 = sadd.s32 1, %s11
  $region7: #{policy_forward.1} parent=0 // loop_footer_branch
    %10 = sbr.rel target = $region3
  $region8: #{policy_forward.1} parent=0 // loop_exit
    _

</llo_original>
